<compile_context>
chip_gen: v7x
topology: tpu7x:2x2x1
jax: 0.10.0
libtpu: 0.0.40
codegen_flags: <defaults>
</compile_context>

<pallas_src>
import functools

import jax
import jax.numpy as jnp
from jax.experimental import pallas as pl
from jax.experimental.pallas import tpu as pltpu

H1 = 128   # fc1 out features
H2 = 64    # fc2 out features
TB = 128   # batch tile (rows per grid step); keeps intermediates in vregs


def _mlp_kernel(x_ref, w1_ref, b1_ref, w2_ref, b2_ref, w3_ref, b3_ref, o_ref):
    # x tile: (TB, Dp) bf16; weights resident in VMEM for every grid step.
    x = x_ref[...]

    # fc1: bf16 MXU matmul, f32 accumulate; bias + ReLU on VPU in f32.
    h1 = jnp.dot(x, w1_ref[...], preferred_element_type=jnp.float32)
    h1 = jnp.maximum(h1 + b1_ref[...], 0.0)                       # (TB, 128) f32

    # fc2: cast activation to bf16 only for the MXU operand.
    h2 = jnp.dot(h1.astype(jnp.bfloat16), w2_ref[...],
                 preferred_element_type=jnp.float32)
    h2 = jnp.maximum(h2 + b2_ref[...], 0.0)                       # (TB, 64) f32

    # fc3 (out features = 1): VPU multiply + XLU lane reduction instead of a
    # 1-column MXU matmul.  w3_ref is the (1, 64) row vector, f32.
    out = jnp.sum(h2 * w3_ref[...], axis=-1, keepdims=True) + b3_ref[...]

    o_ref[...] = out.astype(o_ref.dtype)                          # (TB, 1)


@functools.partial(jax.jit, static_argnames=())
def simple_nn_forward(x, params):
    """x: (B, D) float32; params: dict of (in,out) weights and (1,out) biases."""
    B, D = x.shape

    # --- wrapper-side layout prep (cheap, one-time per call) -----------------
    # Zero-pad the feature dim to a multiple of 128 lanes (34 -> 128 here the
    # compiler would pad anyway; explicit padding gives aligned loads).
    Dp = max(128, ((D + 127) // 128) * 128)
    # Zero-pad the batch to a multiple of TB so the grid is exact.
    Bp = ((B + TB - 1) // TB) * TB

    x_p = jnp.zeros((Bp, Dp), jnp.float32).at[:B, :D].set(x).astype(jnp.bfloat16)
    w1 = jnp.zeros((Dp, H1), jnp.float32).at[:D, :].set(params["w1"]).astype(jnp.bfloat16)
    w2 = params["w2"].astype(jnp.bfloat16)                  # (128, 64)
    b1 = params["b1"]                                       # (1, 128) f32
    b2 = params["b2"]                                       # (1, 64)  f32
    w3_row = params["w3"].reshape(1, H2)                    # (1, 64)  f32 (VPU path)
    b3 = params["b3"]                                       # (1, 1)   f32

    grid = (Bp // TB,)

    flops = 2 * Bp * (Dp * H1 + H1 * H2 + H2)
    bytes_accessed = (x_p.size * 2 + w1.size * 2 + w2.size * 2
                      + b1.size * 4 + b2.size * 4 + w3_row.size * 4 + b3.size * 4
                      + Bp * 1 * 4)

    out_p = pl.pallas_call(
        _mlp_kernel,
        out_shape=jax.ShapeDtypeStruct((Bp, 1), jnp.float32),
        grid=grid,
        in_specs=[
            pl.BlockSpec((TB, Dp), lambda i: (i, 0)),   # x: streamed over batch
            pl.BlockSpec((Dp, H1), lambda i: (0, 0)),   # w1: resident
            pl.BlockSpec((1, H1),  lambda i: (0, 0)),   # b1: resident
            pl.BlockSpec((H1, H2), lambda i: (0, 0)),   # w2: resident
            pl.BlockSpec((1, H2),  lambda i: (0, 0)),   # b2: resident
            pl.BlockSpec((1, H2),  lambda i: (0, 0)),   # w3 row: resident
            pl.BlockSpec((1, 1),   lambda i: (0, 0)),   # b3: resident
        ],
        out_specs=pl.BlockSpec((TB, 1), lambda i: (i, 0)),
        compiler_params=pltpu.CompilerParams(
            dimension_semantics=("parallel",)),
        cost_estimate=pl.CostEstimate(
            flops=flops, transcendentals=0, bytes_accessed=bytes_accessed),
    )(x_p, w1, b1, w2, b2, w3_row, b3)

    return out_p[:B]


def init_params(key, input_size):
    """Deterministic init mirroring PyTorch nn.Linear default U(-1/sqrt(fan_in), +1/sqrt(fan_in))."""
    def linear(key, fan_in, fan_out):
        kw, kb = jax.random.split(key)
        bound = 1.0 / jnp.sqrt(fan_in)
        w = jax.random.uniform(kw, (fan_in, fan_out), jnp.float32, -bound, bound)
        b = jax.random.uniform(kb, (1, fan_out), jnp.float32, -bound, bound)
        return w, b

    k1, k2, k3 = jax.random.split(key, 3)
    w1, b1 = linear(k1, input_size, H1)
    w2, b2 = linear(k2, H1, H2)
    w3, b3 = linear(k3, H2, 1)
    return {"w1": w1, "b1": b1, "w2": w2, "b2": b2, "w3": w3, "b3": b3}


def reference_forward_bf16(x, p):
    """Reference with the same bf16-operand / f32-accumulate scheme as the kernel."""
    h1 = jnp.dot(x.astype(jnp.bfloat16), p["w1"].astype(jnp.bfloat16),
                 preferred_element_type=jnp.float32)
    h1 = jnp.maximum(h1 + p["b1"], 0.0)
    h2 = jnp.dot(h1.astype(jnp.bfloat16), p["w2"].astype(jnp.bfloat16),
                 preferred_element_type=jnp.float32)
    h2 = jnp.maximum(h2 + p["b2"], 0.0)
    return h2 @ p["w3"] + p["b3"]


def reference_forward_f32(x, p):
    h1 = jnp.maximum(x @ p["w1"] + p["b1"], 0.0)
    h2 = jnp.maximum(h1 @ p["w2"] + p["b2"], 0.0)
    return h2 @ p["w3"] + p["b3"]


if __name__ == "__main__":
    input_size = 34   # 17 pose keypoints * 2 coords (synthetic stand-in)
    batch = 8         # small test batch; kernel tiles/pads batch internally

    key = jax.random.PRNGKey(0)
    kx, kp = jax.random.split(key)
    x = jax.random.normal(kx, (batch, input_size), jnp.float32)
    params = init_params(kp, input_size)

    out = simple_nn_forward(x, params)
    out = jax.block_until_ready(out)

    assert out.shape == (batch, 1)

    ref_bf16 = reference_forward_bf16(x, params)
    ref_f32 = reference_forward_f32(x, params)
    assert jnp.allclose(out, ref_bf16, atol=2e-3, rtol=2e-3)
    assert jnp.allclose(out, ref_f32, atol=1e-1, rtol=1e-1)

    print("KERNEL_OK")
</pallas_src>

<mosaic_0001>
module attributes {stable_mosaic.version = 11 : i64} {
  func.func @_mlp_kernel(%arg0: i32, %arg1: memref<128x128xbf16, #tpu.memory_space<vmem>>, %arg2: memref<128x128xbf16, #tpu.memory_space<vmem>>, %arg3: memref<1x128xf32, #tpu.memory_space<vmem>>, %arg4: memref<128x64xbf16, #tpu.memory_space<vmem>>, %arg5: memref<1x64xf32, #tpu.memory_space<vmem>>, %arg6: memref<1x64xf32, #tpu.memory_space<vmem>>, %arg7: memref<1x1xf32, #tpu.memory_space<vmem>>, %arg8: memref<128x1xf32, #tpu.memory_space<vmem>>) attributes {dimension_semantics = [#tpu.dimension_semantics<parallel>], iteration_bounds = array<i64: 1>, scalar_prefetch = 0 : i64, scratch_operands = 0 : i64, tpu.core_type = #tpu.core_type<tc>, window_params = [{transform_indices = @transform_0, window_bounds = array<i64: 128, 128>}, {pipeline_mode = #tpu.pipeline_mode<synchronous>, transform_indices = @transform_1, window_bounds = array<i64: 128, 128>}, {pipeline_mode = #tpu.pipeline_mode<synchronous>, transform_indices = @transform_2, window_bounds = array<i64: 1, 128>}, {pipeline_mode = #tpu.pipeline_mode<synchronous>, transform_indices = @transform_3, window_bounds = array<i64: 128, 64>}, {pipeline_mode = #tpu.pipeline_mode<synchronous>, transform_indices = @transform_4, window_bounds = array<i64: 1, 64>}, {pipeline_mode = #tpu.pipeline_mode<synchronous>, transform_indices = @transform_5, window_bounds = array<i64: 1, 64>}, {pipeline_mode = #tpu.pipeline_mode<synchronous>, transform_indices = @transform_6, window_bounds = array<i64: 1, 1>}, {transform_indices = @transform_7, window_bounds = array<i64: 128, 1>}]} {
    %c0 = arith.constant 0 : index
    %c0_0 = arith.constant 0 : index
    %0 = vector.load %arg1[%c0, %c0_0] : memref<128x128xbf16, #tpu.memory_space<vmem>>, vector<128x128xbf16>
    %c0_1 = arith.constant 0 : index
    %c0_2 = arith.constant 0 : index
    %1 = vector.load %arg2[%c0_1, %c0_2] : memref<128x128xbf16, #tpu.memory_space<vmem>>, vector<128x128xbf16>
    %cst = arith.constant dense<0.000000e+00> : vector<128x128xf32>
    %2 = tpu.matmul %0, %1, %cst {dimension_numbers = #tpu.dot_dimension_numbers<[1], [0], [0], [1], [0, 0, 1, 1], [], []>} : vector<128x128xbf16>, vector<128x128xbf16>, vector<128x128xf32> -> vector<128x128xf32>
    %c0_3 = arith.constant 0 : index
    %c0_4 = arith.constant 0 : index
    %3 = vector.load %arg3[%c0_3, %c0_4] : memref<1x128xf32, #tpu.memory_space<vmem>>, vector<1x128xf32>
    %4 = vector.broadcast %3 : vector<1x128xf32> to vector<128x128xf32>
    %5 = arith.addf %2, %4 : vector<128x128xf32>
    %cst_5 = arith.constant 0.000000e+00 : f32
    %6 = vector.broadcast %cst_5 : f32 to vector<128x128xf32>
    %7 = arith.maximumf %5, %6 : vector<128x128xf32>
    %8 = arith.truncf %7 : vector<128x128xf32> to vector<128x128xbf16>
    %c0_6 = arith.constant 0 : index
    %c0_7 = arith.constant 0 : index
    %9 = vector.load %arg4[%c0_6, %c0_7] : memref<128x64xbf16, #tpu.memory_space<vmem>>, vector<128x64xbf16>
    %cst_8 = arith.constant dense<0.000000e+00> : vector<128x64xf32>
    %10 = tpu.matmul %8, %9, %cst_8 {dimension_numbers = #tpu.dot_dimension_numbers<[1], [0], [0], [1], [0, 0, 1, 1], [], []>} : vector<128x128xbf16>, vector<128x64xbf16>, vector<128x64xf32> -> vector<128x64xf32>
    %c0_9 = arith.constant 0 : index
    %c0_10 = arith.constant 0 : index
    %11 = vector.load %arg5[%c0_9, %c0_10] : memref<1x64xf32, #tpu.memory_space<vmem>>, vector<1x64xf32>
    %12 = vector.broadcast %11 : vector<1x64xf32> to vector<128x64xf32>
    %13 = arith.addf %10, %12 : vector<128x64xf32>
    %cst_11 = arith.constant 0.000000e+00 : f32
    %14 = vector.broadcast %cst_11 : f32 to vector<128x64xf32>
    %15 = arith.maximumf %13, %14 : vector<128x64xf32>
    %c0_12 = arith.constant 0 : index
    %c0_13 = arith.constant 0 : index
    %16 = vector.load %arg6[%c0_12, %c0_13] : memref<1x64xf32, #tpu.memory_space<vmem>>, vector<1x64xf32>
    %17 = vector.broadcast %16 : vector<1x64xf32> to vector<128x64xf32>
    %18 = arith.mulf %15, %17 : vector<128x64xf32>
    %cst_14 = arith.constant dense<0.000000e+00> : vector<128xf32>
    %19 = vector.multi_reduction <add>, %18, %cst_14 [1] : vector<128x64xf32> to vector<128xf32>
    %20 = vector.shape_cast %19 : vector<128xf32> to vector<128x1xf32>
    %c0_15 = arith.constant 0 : index
    %c0_16 = arith.constant 0 : index
    %21 = vector.load %arg7[%c0_15, %c0_16] : memref<1x1xf32, #tpu.memory_space<vmem>>, vector<1x1xf32>
    %22 = vector.broadcast %21 : vector<1x1xf32> to vector<128x1xf32>
    %23 = arith.addf %20, %22 : vector<128x1xf32>
    %c0_17 = arith.constant 0 : index
    %c0_18 = arith.constant 0 : index
    %24 = vector.load %arg8[%c0_17, %c0_18] : memref<128x1xf32, #tpu.memory_space<vmem>>, vector<128x1xf32>
    tpu.vector_store %arg8[%c0_17, %c0_18], %23 {strides = array<i32>} : memref<128x1xf32, #tpu.memory_space<vmem>>, vector<128x1xf32>,
    return
  }
  func.func @transform_0(%arg0: i32) -> (i32, i32) {
    %c0_i32 = arith.constant 0 : i32
    %c0_i32_0 = arith.constant 0 : i32
    return %arg0, %c0_i32 : i32, i32
  }
  func.func @transform_1(%arg0: i32) -> (i32, i32) {
    %c0_i32 = arith.constant 0 : i32
    %c0_i32_0 = arith.constant 0 : i32
    %c0_i32_1 = arith.constant 0 : i32
    return %c0_i32, %c0_i32_0 : i32, i32
  }
  func.func @transform_2(%arg0: i32) -> (i32, i32) {
    %c0_i32 = arith.constant 0 : i32
    %c0_i32_0 = arith.constant 0 : i32
    %c0_i32_1 = arith.constant 0 : i32
    return %c0_i32, %c0_i32_0 : i32, i32
  }
  func.func @transform_3(%arg0: i32) -> (i32, i32) {
    %c0_i32 = arith.constant 0 : i32
    %c0_i32_0 = arith.constant 0 : i32
    %c0_i32_1 = arith.constant 0 : i32
    return %c0_i32, %c0_i32_0 : i32, i32
  }
  func.func @transform_4(%arg0: i32) -> (i32, i32) {
    %c0_i32 = arith.constant 0 : i32
    %c0_i32_0 = arith.constant 0 : i32
    %c0_i32_1 = arith.constant 0 : i32
    return %c0_i32, %c0_i32_0 : i32, i32
  }
  func.func @transform_5(%arg0: i32) -> (i32, i32) {
    %c0_i32 = arith.constant 0 : i32
    %c0_i32_0 = arith.constant 0 : i32
    %c0_i32_1 = arith.constant 0 : i32
    return %c0_i32, %c0_i32_0 : i32, i32
  }
  func.func @transform_6(%arg0: i32) -> (i32, i32) {
    %c0_i32 = arith.constant 0 : i32
    %c0_i32_0 = arith.constant 0 : i32
    %c0_i32_1 = arith.constant 0 : i32
    return %c0_i32, %c0_i32_0 : i32, i32
  }
  func.func @transform_7(%arg0: i32) -> (i32, i32) {
    %c0_i32 = arith.constant 0 : i32
    %c0_i32_0 = arith.constant 0 : i32
    return %arg0, %c0_i32 : i32, i32
  }
}

</mosaic_0001>

<llo_original>
// kernel: simple_nn_forward.1
$region0: #{simple_nn_forward.1}
  #allocation0 [shape = 'u32[]', space=smem, size = 0x4, offset = 0x4, fixed_abs, tag = 'smem constant byte address 0x4 - core index']
  #allocation1 [shape = 'u32[144,128]{1,0:T(1,128)}', space=vmem, size = 0x12000, scoped, tag = 'internal scratch']
  #allocation2 [shape = 'f32[1,1]{1,0:T(1,128)S(1)}', space=vmem, size = 0x200, scoped, tag = 'scoped memory for simple_nn_forward.1']
  %s0 = inlined_call_operand.vmem [shape: bf16[128,128], index: 0, kind: input, shape index: {}]
  %s1 = inlined_call_operand.vmem [shape: bf16[128,128], index: 1, kind: input, shape index: {}]
  %s2 = inlined_call_operand.vmem [shape: f32[1,128], index: 2, kind: input, shape index: {}]
  %s3 = inlined_call_operand.vmem [shape: bf16[128,64], index: 3, kind: input, shape index: {}]
  %s4 = inlined_call_operand.vmem [shape: f32[1,64], index: 4, kind: input, shape index: {}]
  %s5 = inlined_call_operand.vmem [shape: f32[1,64], index: 5, kind: input, shape index: {}]
  %s6 = inlined_call_operand.<no memory space> [shape: f32[1,1], index: 6, kind: input, shape index: {}]
  %s7 = inlined_call_operand.vmem [shape: f32[128,1], index: 7, kind: output, shape index: {}]
  %s8 = sld [smem:[#allocation0]]
  $region38: #{simple_nn_forward.1} parent=0
    _
  %s10 = ssub.s32 1, %s8
  %s11 = scalar_select 0, %s10, %s8
  %v12 = vstv %s6
  %13 = vst [vmem:[#allocation2] sm:$0x1] %v12
  // Predicated region
  $region2: #{simple_nn_forward.1} parent=0 // pred_check
    _
  $region3: #{simple_nn_forward.1} parent=0 // pred_check_branch
    %15 = sbr.rel (0) target = $region5
  $region4: #{simple_nn_forward.1} parent=0 // pred_region
    _
  $region5: #{simple_nn_forward.1} parent=0 // pred_fallthru
    _
  // Predicated region
  $region6: #{simple_nn_forward.1} parent=0 // pred_check
    _
  $region7: #{simple_nn_forward.1} parent=0 // pred_check_branch
    %17 = sbr.rel (0) target = $region9
  $region8: #{simple_nn_forward.1} parent=0 // pred_region
    _
  $region9: #{simple_nn_forward.1} parent=0 // pred_fallthru
    _
  // Predicated region
  $region10: #{simple_nn_forward.1} parent=0 // pred_check
    _
  $region11: #{simple_nn_forward.1} parent=0 // pred_check_branch
    %19 = sbr.rel (0) target = $region13
  $region12: #{simple_nn_forward.1} parent=0 // pred_region
    _
  $region13: #{simple_nn_forward.1} parent=0 // pred_fallthru
    _
  // Predicated region
  $region14: #{simple_nn_forward.1} parent=0 // pred_check
    _
  $region15: #{simple_nn_forward.1} parent=0 // pred_check_branch
    %21 = sbr.rel (0) target = $region17
  $region16: #{simple_nn_forward.1} parent=0 // pred_region
    _
  $region17: #{simple_nn_forward.1} parent=0 // pred_fallthru
    _
  // Predicated region
  $region18: #{simple_nn_forward.1} parent=0 // pred_check
    _
  $region19: #{simple_nn_forward.1} parent=0 // pred_check_branch
    %23 = sbr.rel (0) target = $region21
  $region20: #{simple_nn_forward.1} parent=0 // pred_region
    _
  $region21: #{simple_nn_forward.1} parent=0 // pred_fallthru
    _
  // Predicated region
  $region22: #{simple_nn_forward.1} parent=0 // pred_check
    _
  $region23: #{simple_nn_forward.1} parent=0 // pred_check_branch
    %25 = sbr.rel (0) target = $region25
  $region24: #{simple_nn_forward.1} parent=0 // pred_region
    _
  $region25: #{simple_nn_forward.1} parent=0 // pred_fallthru
    _
  // Predicated region
  $region26: #{simple_nn_forward.1} parent=0 // pred_check
    _
  $region27: #{simple_nn_forward.1} parent=0 // pred_check_branch
    %27 = sbr.rel (0) target = $region29
  $region28: #{simple_nn_forward.1} parent=0 // pred_region
    _
  $region29: #{simple_nn_forward.1} parent=0 // pred_fallthru
    _
  %v29 = vld [vmem:[%s0] sm:$0xf]
  %v30 = vld [vmem:[%s0 + $0x4] sm:$0xf]
  %v31 = vld [vmem:[%s0 + $0x8] sm:$0xf]
  %v32 = vld [vmem:[%s0 + $0xc] sm:$0xf]
  %v33 = vld [vmem:[%s0 + $0x10] sm:$0xf]
  %v34 = vld [vmem:[%s0 + $0x14] sm:$0xf]
  %v35 = vld [vmem:[%s0 + $0x18] sm:$0xf]
  %v36 = vld [vmem:[%s0 + $0x1c] sm:$0xf]
  %v37 = vld [vmem:[%s0 + $0x20] sm:$0xf]
  %v38 = vld [vmem:[%s0 + $0x24] sm:$0xf]
  %v39 = vld [vmem:[%s0 + $0x28] sm:$0xf]
  %v40 = vld [vmem:[%s0 + $0x2c] sm:$0xf]
  %v41 = vld [vmem:[%s0 + $0x30] sm:$0xf]
  %v42 = vld [vmem:[%s0 + $0x34] sm:$0xf]
  %v43 = vld [vmem:[%s0 + $0x38] sm:$0xf]
  %v44 = vld [vmem:[%s0 + $0x3c] sm:$0xf]
  %v45 = vld [vmem:[%s1] sm:$0xf]
  %v46 = vld [vmem:[%s1 + $0x4] sm:$0xf]
  %v47 = vld [vmem:[%s1 + $0x8] sm:$0xf]
  %v48 = vld [vmem:[%s1 + $0xc] sm:$0xf]
  %v49 = vld [vmem:[%s1 + $0x10] sm:$0xf]
  %v50 = vld [vmem:[%s1 + $0x14] sm:$0xf]
  %v51 = vld [vmem:[%s1 + $0x18] sm:$0xf]
  %v52 = vld [vmem:[%s1 + $0x1c] sm:$0xf]
  %v53 = vld [vmem:[%s1 + $0x20] sm:$0xf]
  %v54 = vld [vmem:[%s1 + $0x24] sm:$0xf]
  %v55 = vld [vmem:[%s1 + $0x28] sm:$0xf]
  %v56 = vld [vmem:[%s1 + $0x2c] sm:$0xf]
  %v57 = vld [vmem:[%s1 + $0x30] sm:$0xf]
  %v58 = vld [vmem:[%s1 + $0x34] sm:$0xf]
  %v59 = vld [vmem:[%s1 + $0x38] sm:$0xf]
  %v60 = vld [vmem:[%s1 + $0x3c] sm:$0xf]
  %v61 = vld [vmem:[%s2] sm:$0x1]
  %v63 = vlaneseq
  %v64 = vshrl.u32 %v63, 7
  %v65 = vsub.s32 0, %v64
  %v66 = vrot.slane %v61, %v65
  %v84 = vunpack.c.l.b16 %v29
  %v85 = vunpack.c.l.b16 %v30
  %v86 = vunpack.c.l.b16 %v31
  %v87 = vunpack.c.l.b16 %v32
  %v88 = vunpack.c.l.b16 %v33
  %v89 = vunpack.c.l.b16 %v34
  %v90 = vunpack.c.l.b16 %v35
  %v91 = vunpack.c.l.b16 %v36
  %v92 = vunpack.c.l.b16 %v37
  %v93 = vunpack.c.l.b16 %v38
  %v94 = vunpack.c.l.b16 %v39
  %v95 = vunpack.c.l.b16 %v40
  %v96 = vunpack.c.l.b16 %v41
  %v97 = vunpack.c.l.b16 %v42
  %v98 = vunpack.c.l.b16 %v43
  %v99 = vunpack.c.l.b16 %v44
  %v100 = vpack.c.b16 %v85, %v84
  %v101 = vpack.c.b16 %v87, %v86
  %v102 = vpack.c.b16 %v89, %v88
  %v103 = vpack.c.b16 %v91, %v90
  %v104 = vpack.c.b16 %v93, %v92
  %v105 = vpack.c.b16 %v95, %v94
  %v106 = vpack.c.b16 %v97, %v96
  %v107 = vpack.c.b16 %v99, %v98
  %v132 = vunpack.c.l.b16 %v45
  %v133 = vunpack.c.l.b16 %v46
  %v134 = vunpack.c.l.b16 %v47
  %v135 = vunpack.c.l.b16 %v48
  %v136 = vunpack.c.l.b16 %v49
  %v137 = vunpack.c.l.b16 %v50
  %v138 = vunpack.c.l.b16 %v51
  %v139 = vunpack.c.l.b16 %v52
  %v140 = vunpack.c.l.b16 %v53
  %v141 = vunpack.c.l.b16 %v54
  %v142 = vunpack.c.l.b16 %v55
  %v143 = vunpack.c.l.b16 %v56
  %v144 = vunpack.c.l.b16 %v57
  %v145 = vunpack.c.l.b16 %v58
  %v146 = vunpack.c.l.b16 %v59
  %v147 = vunpack.c.l.b16 %v60
  %v148 = vpack.c.b16 %v133, %v132
  %v149 = vpack.c.b16 %v135, %v134
  %v150 = vpack.c.b16 %v137, %v136
  %v151 = vpack.c.b16 %v139, %v138
  %v152 = vpack.c.b16 %v141, %v140
  %v153 = vpack.c.b16 %v143, %v142
  %v154 = vpack.c.b16 %v145, %v144
  %v155 = vpack.c.b16 %v147, %v146
  %164 = vmatprep.subr.bf16.mxu0 0
  %165 = vmatpush1.bf16.msra.mxu0 %v148
  %166 = vmatprep.subr.bf16.mxu0 0
  %167 = vmatpush1.bf16.msra.mxu0 %v149
  %168 = vmatprep.subr.bf16.mxu0 0
  %169 = vmatpush1.bf16.msra.mxu0 %v150
  %170 = vmatprep.subr.bf16.mxu0 0
  %171 = vmatpush1.bf16.msra.mxu0 %v151
  %172 = vmatprep.subr.bf16.mxu0 0
  %173 = vmatpush1.bf16.msra.mxu0 %v152
  %174 = vmatprep.subr.bf16.mxu0 0
  %175 = vmatpush1.bf16.msra.mxu0 %v153
  %176 = vmatprep.subr.bf16.mxu0 0
  %177 = vmatpush1.bf16.msra.mxu0 %v154
  %178 = vmatprep.subr.bf16.mxu0 0
  %179 = vmatpush1.bf16.msra.mxu0 %v155
  %180 = vmatprep.subr.bf16.mxu0 0
  %181 = vmatpush1.bf16.msra.mxu0 0
  %182 = vmatprep.subr.bf16.mxu0 0
  %183 = vmatpush1.bf16.msra.mxu0 0
  %184 = vmatprep.subr.bf16.mxu0 0
  %185 = vmatpush1.bf16.msra.mxu0 0
  %186 = vmatprep.subr.bf16.mxu0 0
  %187 = vmatpush1.bf16.msra.mxu0 0
  %188 = vmatprep.subr.bf16.mxu0 0
  %189 = vmatpush1.bf16.msra.mxu0 0
  %190 = vmatprep.subr.bf16.mxu0 0
  %191 = vmatpush1.bf16.msra.mxu0 0
  %192 = vmatprep.subr.bf16.mxu0 0
  %193 = vmatpush1.bf16.msra.mxu0 0
  %194 = vmatprep.subr.bf16.mxu0 0
  %195 = vmatpush1.bf16.msra.mxu0 0
  %196 = vmatprep.mubr.bf16.mxu0 0
  %197 = vmatmul.mubr.bf16.gmra.mrb[0].mxu0 %v100
  %v198 = vpop.f32.mrb[0].mxu0
  %v199 = vadd.f32 %v66, %v198
  %v200 = vpop.f32.mrb[0].mxu0
  %v201 = vpop.f32.mrb[0].mxu0
  %v202 = vadd.f32 %v66, %v201
  %v203 = vpop.f32.mrb[0].mxu0
  %204 = vmatprep.mubr.bf16.mxu0 0
  %205 = vmatmul.mubr.bf16.gmra.mrb[0].mxu0 %v101
  %v206 = vpop.f32.mrb[0].mxu0
  %v207 = vadd.f32 %v66, %v206
  %v208 = vpop.f32.mrb[0].mxu0
  %v209 = vpop.f32.mrb[0].mxu0
  %v210 = vadd.f32 %v66, %v209
  %v211 = vpop.f32.mrb[0].mxu0
  %212 = vmatprep.mubr.bf16.mxu0 0
  %213 = vmatmul.mubr.bf16.gmra.mrb[0].mxu0 %v102
  %v214 = vpop.f32.mrb[0].mxu0
  %v215 = vadd.f32 %v66, %v214
  %v216 = vpop.f32.mrb[0].mxu0
  %v217 = vpop.f32.mrb[0].mxu0
  %v218 = vadd.f32 %v66, %v217
  %v219 = vpop.f32.mrb[0].mxu0
  %220 = vmatprep.mubr.bf16.mxu0 0
  %221 = vmatmul.mubr.bf16.gmra.mrb[0].mxu0 %v103
  %v222 = vpop.f32.mrb[0].mxu0
  %v223 = vadd.f32 %v66, %v222
  %v224 = vpop.f32.mrb[0].mxu0
  %v225 = vpop.f32.mrb[0].mxu0
  %v226 = vadd.f32 %v66, %v225
  %v227 = vpop.f32.mrb[0].mxu0
  %228 = vmatprep.mubr.bf16.mxu0 0
  %229 = vmatmul.mubr.bf16.gmra.mrb[0].mxu0 %v104
  %v230 = vpop.f32.mrb[0].mxu0
  %v231 = vadd.f32 %v66, %v230
  %v232 = vpop.f32.mrb[0].mxu0
  %v233 = vpop.f32.mrb[0].mxu0
  %v234 = vadd.f32 %v66, %v233
  %v235 = vpop.f32.mrb[0].mxu0
  %236 = vmatprep.mubr.bf16.mxu0 0
  %237 = vmatmul.mubr.bf16.gmra.mrb[0].mxu0 %v105
  %v238 = vpop.f32.mrb[0].mxu0
  %v239 = vadd.f32 %v66, %v238
  %v240 = vpop.f32.mrb[0].mxu0
  %v241 = vpop.f32.mrb[0].mxu0
  %v242 = vadd.f32 %v66, %v241
  %v243 = vpop.f32.mrb[0].mxu0
  %244 = vmatprep.mubr.bf16.mxu0 0
  %245 = vmatmul.mubr.bf16.gmra.mrb[0].mxu0 %v106
  %v246 = vpop.f32.mrb[0].mxu0
  %v247 = vadd.f32 %v66, %v246
  %v248 = vpop.f32.mrb[0].mxu0
  %v249 = vpop.f32.mrb[0].mxu0
  %v250 = vadd.f32 %v66, %v249
  %v251 = vpop.f32.mrb[0].mxu0
  %252 = vmatprep.mubr.bf16.mxu0 0
  %253 = vmatmul.mubr.bf16.gmra.mrb[0].mxu0 %v107
  %v254 = vpop.f32.mrb[0].mxu0
  %v255 = vadd.f32 %v66, %v254
  %v256 = vpop.f32.mrb[0].mxu0
  %v257 = vpop.f32.mrb[0].mxu0
  %v258 = vadd.f32 %v66, %v257
  %v259 = vpop.f32.mrb[0].mxu0
  %260 = vdwg.mxu0
  %v261 = vmax.f32 %v199, 0.0
  %v262 = vmax.f32 %v202, 0.0
  %v263 = vmax.f32 %v207, 0.0
  %v264 = vmax.f32 %v210, 0.0
  %v265 = vmax.f32 %v215, 0.0
  %v266 = vmax.f32 %v218, 0.0
  %v267 = vmax.f32 %v223, 0.0
  %v268 = vmax.f32 %v226, 0.0
  %v269 = vmax.f32 %v231, 0.0
  %v270 = vmax.f32 %v234, 0.0
  %v271 = vmax.f32 %v239, 0.0
  %v272 = vmax.f32 %v242, 0.0
  %v273 = vmax.f32 %v247, 0.0
  %v274 = vmax.f32 %v250, 0.0
  %v275 = vmax.f32 %v255, 0.0
  %v276 = vmax.f32 %v258, 0.0
  %v277 = vpack.c.bf16 %v262, %v261
  %v278 = vpack.c.bf16 %v264, %v263
  %v279 = vpack.c.bf16 %v266, %v265
  %v280 = vpack.c.bf16 %v268, %v267
  %v281 = vpack.c.bf16 %v270, %v269
  %v282 = vpack.c.bf16 %v272, %v271
  %v283 = vpack.c.bf16 %v274, %v273
  %v284 = vpack.c.bf16 %v276, %v275
  %v285 = vld [vmem:[%s3] sm:$0xf]
  %v286 = vld [vmem:[%s3 + $0x4] sm:$0xf]
  %v287 = vld [vmem:[%s3 + $0x8] sm:$0xf]
  %v288 = vld [vmem:[%s3 + $0xc] sm:$0xf]
  %v289 = vld [vmem:[%s3 + $0x10] sm:$0xf]
  %v290 = vld [vmem:[%s3 + $0x14] sm:$0xf]
  %v291 = vld [vmem:[%s3 + $0x18] sm:$0xf]
  %v292 = vld [vmem:[%s3 + $0x1c] sm:$0xf]
  %v293 = vld [vmem:[%s3 + $0x20] sm:$0xf]
  %v294 = vld [vmem:[%s3 + $0x24] sm:$0xf]
  %v295 = vld [vmem:[%s3 + $0x28] sm:$0xf]
  %v296 = vld [vmem:[%s3 + $0x2c] sm:$0xf]
  %v297 = vld [vmem:[%s3 + $0x30] sm:$0xf]
  %v298 = vld [vmem:[%s3 + $0x34] sm:$0xf]
  %v299 = vld [vmem:[%s3 + $0x38] sm:$0xf]
  %v300 = vld [vmem:[%s3 + $0x3c] sm:$0xf]
  %v301 = vld [vmem:[%s4] sm:$0x1]
  %v303 = vlaneseq
  %v304 = vshrl.u32 %v303, 7
  %v305 = vsub.s32 0, %v304
  %v306 = vrot.slane %v301, %v305
  %v324 = vunpack.c.l.b16 %v285
  %v325 = vunpack.c.l.b16 %v286
  %v326 = vunpack.c.l.b16 %v287
  %v327 = vunpack.c.l.b16 %v288
  %v328 = vunpack.c.l.b16 %v289
  %v329 = vunpack.c.l.b16 %v290
  %v330 = vunpack.c.l.b16 %v291
  %v331 = vunpack.c.l.b16 %v292
  %v332 = vunpack.c.l.b16 %v293
  %v333 = vunpack.c.l.b16 %v294
  %v334 = vunpack.c.l.b16 %v295
  %v335 = vunpack.c.l.b16 %v296
  %v336 = vunpack.c.l.b16 %v297
  %v337 = vunpack.c.l.b16 %v298
  %v338 = vunpack.c.l.b16 %v299
  %v339 = vunpack.c.l.b16 %v300
  %v340 = vpack.c.b16 %v325, %v324
  %v341 = vpack.c.b16 %v327, %v326
  %v342 = vpack.c.b16 %v329, %v328
  %v343 = vpack.c.b16 %v331, %v330
  %v344 = vpack.c.b16 %v333, %v332
  %v345 = vpack.c.b16 %v335, %v334
  %v346 = vpack.c.b16 %v337, %v336
  %v347 = vpack.c.b16 %v339, %v338
  %356 = vmatprep.subr.bf16.mxu0 0
  %357 = vmatpush1.bf16.msra.mxu0 %v340
  %358 = vmatprep.subr.bf16.mxu0 0
  %359 = vmatpush1.bf16.msra.mxu0 %v341
  %360 = vmatprep.subr.bf16.mxu0 0
  %361 = vmatpush1.bf16.msra.mxu0 %v342
  %362 = vmatprep.subr.bf16.mxu0 0
  %363 = vmatpush1.bf16.msra.mxu0 %v343
  %364 = vmatprep.subr.bf16.mxu0 0
  %365 = vmatpush1.bf16.msra.mxu0 %v344
  %366 = vmatprep.subr.bf16.mxu0 0
  %367 = vmatpush1.bf16.msra.mxu0 %v345
  %368 = vmatprep.subr.bf16.mxu0 0
  %369 = vmatpush1.bf16.msra.mxu0 %v346
  %370 = vmatprep.subr.bf16.mxu0 0
  %371 = vmatpush1.bf16.msra.mxu0 %v347
  %372 = vmatprep.subr.bf16.mxu0 0
  %373 = vmatpush1.bf16.msra.mxu0 0
  %374 = vmatprep.subr.bf16.mxu0 0
  %375 = vmatpush1.bf16.msra.mxu0 0
  %376 = vmatprep.subr.bf16.mxu0 0
  %377 = vmatpush1.bf16.msra.mxu0 0
  %378 = vmatprep.subr.bf16.mxu0 0
  %379 = vmatpush1.bf16.msra.mxu0 0
  %380 = vmatprep.subr.bf16.mxu0 0
  %381 = vmatpush1.bf16.msra.mxu0 0
  %382 = vmatprep.subr.bf16.mxu0 0
  %383 = vmatpush1.bf16.msra.mxu0 0
  %384 = vmatprep.subr.bf16.mxu0 0
  %385 = vmatpush1.bf16.msra.mxu0 0
  %386 = vmatprep.subr.bf16.mxu0 0
  %387 = vmatpush1.bf16.msra.mxu0 0
  %388 = vmatprep.mubr.bf16.mxu0 0
  %389 = vmatmul.mubr.bf16.gmra.mrb[0].mxu0 %v277
  %v390 = vpop.f32.mrb[0].mxu0
  %v391 = vadd.f32 %v306, %v390
  %v392 = vpop.f32.mrb[0].mxu0
  %v393 = vpop.f32.mrb[0].mxu0
  %v394 = vadd.f32 %v306, %v393
  %v395 = vpop.f32.mrb[0].mxu0
  %396 = vmatprep.mubr.bf16.mxu0 0
  %397 = vmatmul.mubr.bf16.gmra.mrb[0].mxu0 %v278
  %v398 = vpop.f32.mrb[0].mxu0
  %v399 = vadd.f32 %v306, %v398
  %v400 = vpop.f32.mrb[0].mxu0
  %v401 = vpop.f32.mrb[0].mxu0
  %v402 = vadd.f32 %v306, %v401
  %v403 = vpop.f32.mrb[0].mxu0
  %404 = vmatprep.mubr.bf16.mxu0 0
  %405 = vmatmul.mubr.bf16.gmra.mrb[0].mxu0 %v279
  %v406 = vpop.f32.mrb[0].mxu0
  %v407 = vadd.f32 %v306, %v406
  %v408 = vpop.f32.mrb[0].mxu0
  %v409 = vpop.f32.mrb[0].mxu0
  %v410 = vadd.f32 %v306, %v409
  %v411 = vpop.f32.mrb[0].mxu0
  %412 = vmatprep.mubr.bf16.mxu0 0
  %413 = vmatmul.mubr.bf16.gmra.mrb[0].mxu0 %v280
  %v414 = vpop.f32.mrb[0].mxu0
  %v415 = vadd.f32 %v306, %v414
  %v416 = vpop.f32.mrb[0].mxu0
  %v417 = vpop.f32.mrb[0].mxu0
  %v418 = vadd.f32 %v306, %v417
  %v419 = vpop.f32.mrb[0].mxu0
  %420 = vmatprep.mubr.bf16.mxu0 0
  %421 = vmatmul.mubr.bf16.gmra.mrb[0].mxu0 %v281
  %v422 = vpop.f32.mrb[0].mxu0
  %v423 = vadd.f32 %v306, %v422
  %v424 = vpop.f32.mrb[0].mxu0
  %v425 = vpop.f32.mrb[0].mxu0
  %v426 = vadd.f32 %v306, %v425
  %v427 = vpop.f32.mrb[0].mxu0
  %428 = vmatprep.mubr.bf16.mxu0 0
  %429 = vmatmul.mubr.bf16.gmra.mrb[0].mxu0 %v282
  %v430 = vpop.f32.mrb[0].mxu0
  %v431 = vadd.f32 %v306, %v430
  %v432 = vpop.f32.mrb[0].mxu0
  %v433 = vpop.f32.mrb[0].mxu0
  %v434 = vadd.f32 %v306, %v433
  %v435 = vpop.f32.mrb[0].mxu0
  %436 = vmatprep.mubr.bf16.mxu0 0
  %437 = vmatmul.mubr.bf16.gmra.mrb[0].mxu0 %v283
  %v438 = vpop.f32.mrb[0].mxu0
  %v439 = vadd.f32 %v306, %v438
  %v440 = vpop.f32.mrb[0].mxu0
  %v441 = vpop.f32.mrb[0].mxu0
  %v442 = vadd.f32 %v306, %v441
  %v443 = vpop.f32.mrb[0].mxu0
  %444 = vmatprep.mubr.bf16.mxu0 0
  %445 = vmatmul.mubr.bf16.gmra.mrb[0].mxu0 %v284
  %v446 = vpop.f32.mrb[0].mxu0
  %v447 = vadd.f32 %v306, %v446
  %v448 = vpop.f32.mrb[0].mxu0
  %v449 = vpop.f32.mrb[0].mxu0
  %v450 = vadd.f32 %v306, %v449
  %v451 = vpop.f32.mrb[0].mxu0
  %452 = vdwg.mxu0
  %v453 = vmax.f32 %v391, 0.0
  %v454 = vmax.f32 %v394, 0.0
  %v455 = vmax.f32 %v399, 0.0
  %v456 = vmax.f32 %v402, 0.0
  %v457 = vmax.f32 %v407, 0.0
  %v458 = vmax.f32 %v410, 0.0
  %v459 = vmax.f32 %v415, 0.0
  %v460 = vmax.f32 %v418, 0.0
  %v461 = vmax.f32 %v423, 0.0
  %v462 = vmax.f32 %v426, 0.0
  %v463 = vmax.f32 %v431, 0.0
  %v464 = vmax.f32 %v434, 0.0
  %v465 = vmax.f32 %v439, 0.0
  %v466 = vmax.f32 %v442, 0.0
  %v467 = vmax.f32 %v447, 0.0
  %v468 = vmax.f32 %v450, 0.0
  %v469 = vld [vmem:[%s5] sm:$0x1]
  %v471 = vlaneseq
  %v472 = vshrl.u32 %v471, 7
  %v473 = vsub.s32 0, %v472
  %v474 = vrot.slane %v469, %v473
  %v476 = vmul.f32 %v453, %v474
  %v477 = vmul.f32 %v454, %v474
  %v478 = vmul.f32 %v455, %v474
  %v479 = vmul.f32 %v456, %v474
  %v480 = vmul.f32 %v457, %v474
  %v481 = vmul.f32 %v458, %v474
  %v482 = vmul.f32 %v459, %v474
  %v483 = vmul.f32 %v460, %v474
  %v484 = vmul.f32 %v461, %v474
  %v485 = vmul.f32 %v462, %v474
  %v486 = vmul.f32 %v463, %v474
  %v487 = vmul.f32 %v464, %v474
  %v488 = vmul.f32 %v465, %v474
  %v489 = vmul.f32 %v466, %v474
  %v490 = vmul.f32 %v467, %v474
  %v491 = vmul.f32 %v468, %v474
  %vm492 = vcmask 523264
  %v493 = vsel %vm492, %v476, 0.0
  %494 = vadd.xlane.f32.xlu0 %v493
  %v495 = vpop.xlane.xlu0 %494
  %v496 = vsel %vm492, %v477, 0.0
  %497 = vadd.xlane.f32.xlu0 %v496
  %v498 = vpop.xlane.xlu0 %497
  %v499 = vsel %vm492, %v478, 0.0
  %500 = vadd.xlane.f32.xlu0 %v499
  %v501 = vpop.xlane.xlu0 %500
  %v502 = vsel %vm492, %v479, 0.0
  %503 = vadd.xlane.f32.xlu0 %v502
  %v504 = vpop.xlane.xlu0 %503
  %v505 = vsel %vm492, %v480, 0.0
  %506 = vadd.xlane.f32.xlu0 %v505
  %v507 = vpop.xlane.xlu0 %506
  %v508 = vsel %vm492, %v481, 0.0
  %509 = vadd.xlane.f32.xlu0 %v508
  %v510 = vpop.xlane.xlu0 %509
  %v511 = vsel %vm492, %v482, 0.0
  %512 = vadd.xlane.f32.xlu0 %v511
  %v513 = vpop.xlane.xlu0 %512
  %v514 = vsel %vm492, %v483, 0.0
  %515 = vadd.xlane.f32.xlu0 %v514
  %v516 = vpop.xlane.xlu0 %515
  %v517 = vsel %vm492, %v484, 0.0
  %518 = vadd.xlane.f32.xlu0 %v517
  %v519 = vpop.xlane.xlu0 %518
  %v520 = vsel %vm492, %v485, 0.0
  %521 = vadd.xlane.f32.xlu0 %v520
  %v522 = vpop.xlane.xlu0 %521
  %v523 = vsel %vm492, %v486, 0.0
  %524 = vadd.xlane.f32.xlu0 %v523
  %v525 = vpop.xlane.xlu0 %524
  %v526 = vsel %vm492, %v487, 0.0
  %527 = vadd.xlane.f32.xlu0 %v526
  %v528 = vpop.xlane.xlu0 %527
  %v529 = vsel %vm492, %v488, 0.0
  %530 = vadd.xlane.f32.xlu0 %v529
  %v531 = vpop.xlane.xlu0 %530
  %v532 = vsel %vm492, %v489, 0.0
  %533 = vadd.xlane.f32.xlu0 %v532
  %v534 = vpop.xlane.xlu0 %533
  %v535 = vsel %vm492, %v490, 0.0
  %536 = vadd.xlane.f32.xlu0 %v535
  %v537 = vpop.xlane.xlu0 %536
  %v538 = vsel %vm492, %v491, 0.0
  %539 = vadd.xlane.f32.xlu0 %v538
  %v540 = vpop.xlane.xlu0 %539
  %v541 = vld [vmem:[#allocation2] sm:$0x1]
  %v543 = vlaneseq
  %v544 = vshrl.u32 %v543, 7
  %v545 = vsub.s32 0, %v544
  %v546 = vrot.slane %v541, %v545
  %v548 = vadd.f32 %v495, %v546
  %v549 = vadd.f32 %v498, %v546
  %v550 = vadd.f32 %v501, %v546
  %v551 = vadd.f32 %v504, %v546
  %v552 = vadd.f32 %v507, %v546
  %v553 = vadd.f32 %v510, %v546
  %v554 = vadd.f32 %v513, %v546
  %v555 = vadd.f32 %v516, %v546
  %v556 = vadd.f32 %v519, %v546
  %v557 = vadd.f32 %v522, %v546
  %v558 = vadd.f32 %v525, %v546
  %v559 = vadd.f32 %v528, %v546
  %v560 = vadd.f32 %v531, %v546
  %v561 = vadd.f32 %v534, %v546
  %v562 = vadd.f32 %v537, %v546
  %v563 = vadd.f32 %v540, %v546
  %vm564 = vcmask 7168
  %565 = vst.msk [vmem:[%s7] sm:$0xff] %vm564, %v548
  %566 = vst.msk [vmem:[%s7 + $0x8] sm:$0xff] %vm564, %v549
  %567 = vst.msk [vmem:[%s7 + $0x10] sm:$0xff] %vm564, %v550
  %568 = vst.msk [vmem:[%s7 + $0x18] sm:$0xff] %vm564, %v551
  %569 = vst.msk [vmem:[%s7 + $0x20] sm:$0xff] %vm564, %v552
  %570 = vst.msk [vmem:[%s7 + $0x28] sm:$0xff] %vm564, %v553
  %571 = vst.msk [vmem:[%s7 + $0x30] sm:$0xff] %vm564, %v554
  %572 = vst.msk [vmem:[%s7 + $0x38] sm:$0xff] %vm564, %v555
  %573 = vst.msk [vmem:[%s7 + $0x40] sm:$0xff] %vm564, %v556
  %574 = vst.msk [vmem:[%s7 + $0x48] sm:$0xff] %vm564, %v557
  %575 = vst.msk [vmem:[%s7 + $0x50] sm:$0xff] %vm564, %v558
  %576 = vst.msk [vmem:[%s7 + $0x58] sm:$0xff] %vm564, %v559
  %577 = vst.msk [vmem:[%s7 + $0x60] sm:$0xff] %vm564, %v560
  %578 = vst.msk [vmem:[%s7 + $0x68] sm:$0xff] %vm564, %v561
  %579 = vst.msk [vmem:[%s7 + $0x70] sm:$0xff] %vm564, %v562
  %580 = vst.msk [vmem:[%s7 + $0x78] sm:$0xff] %vm564, %v563
  // Predicated region
  $region30: #{simple_nn_forward.1} parent=0 // pred_check
    _
  $region31: #{simple_nn_forward.1} parent=0 // pred_check_branch
    %582 = sbr.rel (0) target = $region33
  $region32: #{simple_nn_forward.1} parent=0 // pred_region
    _
  $region33: #{simple_nn_forward.1} parent=0 // pred_fallthru
    _
  // Predicated region
  $region34: #{simple_nn_forward.1} parent=0 // pred_check
    _
  $region35: #{simple_nn_forward.1} parent=0 // pred_check_branch
    %584 = sbr.rel (0) target = $region37
  $region36: #{simple_nn_forward.1} parent=0 // pred_region
    _
  $region37: #{simple_nn_forward.1} parent=0 // pred_fallthru
    _

</llo_original>
